<compile_context>
chip_gen: v5e
topology: v5e:2x2
jax: 0.10.0
libtpu: 0.0.40
codegen_flags: <defaults>
</compile_context>

<pallas_src>
import functools

import jax
import jax.numpy as jnp
from jax.experimental import pallas as pl
from jax.experimental.pallas import tpu as pltpu


def _round_up(x, m):
    return ((x + m - 1) // m) * m


# ---------------- fused Pallas kernel (one grid step == one sample) ----------

def _fused_kernel(p_ref, wc_ref, ws_ref, bfc_ref, o_ref, *,
                  s_pad, n_phase, n_pad, n_out):
    # p_ref:   (CKp, n_phase*Spad)  transposed im2col patches (+ all-ones row)
    # wc_ref:  (M, CKp)             conv weight with bias folded in column CK
    # ws_ref:  (Spad, M*n_pad)      FC weight, flatten-permuted, block-diag in m
    # bfc_ref: (1, n_pad)           FC bias (zero-padded)
    # o_ref:   (1, 1, n_out)        logits for this sample

    # 1) Conv2d (+bias) for ALL N*N pooling phases in ONE MXU matmul.
    acc = jnp.dot(wc_ref[...], p_ref[...],
                  preferred_element_type=jnp.float32)      # (M, n_phase*Spad)

    # 2) MaxPool2d(N,N): max over the n_phase lane-aligned column groups
    #    (monotone bias+ReLU), then ReLU.  Pure VPU, stays in vregs.
    pooled = acc[:, 0:s_pad]
    for ph in range(1, n_phase):
        pooled = jnp.maximum(pooled, acc[:, ph * s_pad:(ph + 1) * s_pad])
    z = jnp.maximum(pooled, 0.0)                            # (M, Spad)

    # 3) Flatten (PyTorch NCHW .view order) + Linear(finSize, 10) as ONE
    #    aligned contraction: ws is block-diagonal over m, so
    #    g[m, m*n_pad + o] = sum_s z[m, s] * fc_w[o, m*S + s];
    #    summing the diagonal (1, n_pad) blocks over m gives the logits.
    g = jnp.dot(z, ws_ref[...], preferred_element_type=jnp.float32)  # (M, M*n_pad)
    out = bfc_ref[...]                                      # (1, n_pad)
    for m in range(g.shape[0]):
        out = out + g[m:m + 1, m * n_pad:(m + 1) * n_pad]
    o_ref[0] = out[:, :n_out]


# ---------------- wrapper: one-time XLA layout prep + pallas_call ------------

def conv_layer_net_forward(x, params, N, M, k):
    B, C, H, W = x.shape
    Ho, Wo = H - k + 1, W - k + 1
    Hp, Wp = Ho // N, Wo // N                 # MaxPool2d floor behavior
    S = Hp * Wp
    Spad = _round_up(S, 128)                  # lane-align each phase block
    CK = C * k * k
    CKp = _round_up(CK + 1, 8)                # +1 sublane row for the conv bias
    n_phase = N * N
    n_out = params["fc_b"].shape[-1]
    n_pad = _round_up(n_out, 16)              # M*n_pad = 128 -> lane-dense FC out
    assert params["fc_w"].shape[-1] == M * S

    # Per-sample, phase-major, transposed im2col patches built directly in the
    # merged lane-dense layout with ONE 8-D transpose:
    #   patches[ck, b*(n_phase*Spad) + (di*N+dj)*Spad + (ip*Wp+jp)]
    #       = x[b, c, N*ip + di + kh, N*jp + dj + kw],  ck = c*k*k + kh*k + kw
    # Row CK is all-ones (folds the conv bias into the matmul); pad columns
    # (s >= S) and pad rows stay exactly zero.
    cols = [x[:, :, kh:kh + Ho, kw:kw + Wo] for kh in range(k) for kw in range(k)]
    w8 = jnp.stack(cols, axis=2).reshape(B, C, k, k, Ho, Wo)
    w8 = w8[:, :, :, :, :N * Hp, :N * Wp].reshape(B, C, k, k, Hp, N, Wp, N)
    p = w8.transpose(1, 2, 3, 0, 5, 7, 4, 6).reshape(CK, B, n_phase, S)
    p = jnp.concatenate([p, jnp.ones((1, B, n_phase, S), p.dtype)], axis=0)
    p = jnp.pad(p, ((0, CKp - CK - 1), (0, 0), (0, 0), (0, Spad - S)))
    patches = p.reshape(CKp, B * n_phase * Spad).astype(jnp.float32)

    # Conv weight with bias folded in as column CK: (M, CKp).
    wc = jnp.concatenate(
        [params["conv_w"].reshape(M, CK).astype(jnp.float32),
         params["conv_b"].reshape(M, 1).astype(jnp.float32),
         jnp.zeros((M, CKp - CK - 1), jnp.float32)], axis=1)

    # FC weight: NCHW-flatten permutation folded in, block-diagonal over m,
    # long Spad axis on sublanes, lane-dense M*n_pad column axis.  The zero pad
    # rows (s >= S) keep the padded activation columns out of the logits.
    wfc = params["fc_w"].reshape(n_out, M, S).transpose(2, 1, 0)   # (S, M, 10)
    wfc = jnp.pad(wfc, ((0, Spad - S), (0, 0), (0, n_pad - n_out)))
    ws = wfc.reshape(Spad, M * n_pad).astype(jnp.float32)          # (Spad, 128)

    bfc = jnp.pad(params["fc_b"].reshape(1, n_out),
                  ((0, 0), (0, n_pad - n_out))).astype(jnp.float32)

    kernel = functools.partial(_fused_kernel, s_pad=Spad, n_phase=n_phase,
                               n_pad=n_pad, n_out=n_out)
    out = pl.pallas_call(
        kernel,
        grid=(B,),
        in_specs=[
            pl.BlockSpec((CKp, n_phase * Spad), lambda b: (0, b)),   # per-sample
            pl.BlockSpec((M, CKp), lambda b: (0, 0)),                # weights
            pl.BlockSpec((Spad, M * n_pad), lambda b: (0, 0)),       # pinned to 0
            pl.BlockSpec((1, n_pad), lambda b: (0, 0)),
        ],
        out_specs=pl.BlockSpec((1, 1, n_out), lambda b: (b, 0, 0)),
        out_shape=jax.ShapeDtypeStruct((B, 1, n_out), jnp.float32),
        compiler_params=pltpu.CompilerParams(
            dimension_semantics=("parallel",)),        # both TCs on v7x
    )(patches, wc, ws, bfc)
    return out.reshape(B, n_out)


# ---------------- pure-JAX reference (correctness check only) ----------------

def _reference_forward(x, params, N, M, k):
    y = jax.lax.conv_general_dilated(
        x, params["conv_w"], (1, 1), "VALID",
        dimension_numbers=("NCHW", "OIHW", "NCHW"),
        precision=jax.lax.Precision.HIGHEST)
    y = jnp.maximum(y + params["conv_b"].reshape(1, M, 1, 1), 0.0)
    y = jax.lax.reduce_window(y, -jnp.inf, jax.lax.max,
                              (1, 1, N, N), (1, 1, N, N), "VALID")
    z = y.reshape(y.shape[0], -1)             # PyTorch NCHW .view flatten
    return jnp.dot(z, params["fc_w"].T,
                   precision=jax.lax.Precision.HIGHEST) + params["fc_b"]


if __name__ == "__main__":
    # Hyperparameters from the module: ConvLayerNet(N, M, k) on CIFAR (32x32x3).
    N, M, k = 2, 8, 5
    B, C, H, W = 2, 3, 32, 32
    finSize = int(((33 - k) / N) ** 2 * M)    # 14*14*8 = 1568

    key = jax.random.PRNGKey(0)
    kx, kw1, kb1, kw2, kb2 = jax.random.split(key, 5)
    x = jax.random.normal(kx, (B, C, H, W), jnp.float32)
    params = {
        "conv_w": 0.1 * jax.random.normal(kw1, (M, C, k, k), jnp.float32),
        "conv_b": 0.1 * jax.random.normal(kb1, (M,), jnp.float32),
        "fc_w": 0.05 * jax.random.normal(kw2, (10, finSize), jnp.float32),
        "fc_b": 0.05 * jax.random.normal(kb2, (10,), jnp.float32),
    }

    fwd = jax.jit(functools.partial(conv_layer_net_forward, N=N, M=M, k=k))
    out = fwd(x, params)
    jax.block_until_ready(out)

    assert out.shape == (B, 10) and out.dtype == jnp.float32
    ref = _reference_forward(x, params, N, M, k)
    err = float(jnp.max(jnp.abs(out - ref)))
    assert err < 2e-3, f"mismatch vs JAX reference: max|diff|={err}"
    print("KERNEL_OK")
</pallas_src>

<mosaic_0001>
module attributes {stable_mosaic.version = 11 : i64} {
  func.func @_fused_kernel(%arg0: i32, %arg1: memref<80x1024xf32, #tpu.memory_space<vmem>>, %arg2: memref<8x80xf32, #tpu.memory_space<vmem>>, %arg3: memref<256x128xf32, #tpu.memory_space<vmem>>, %arg4: memref<1x16xf32, #tpu.memory_space<vmem>>, %arg5: memref<1x1x10xf32, #tpu.memory_space<vmem>>) attributes {dimension_semantics = [#tpu.dimension_semantics<parallel>], iteration_bounds = array<i64: 2>, scalar_prefetch = 0 : i64, scratch_operands = 0 : i64, tpu.core_type = #tpu.core_type<tc>, window_params = [{transform_indices = @transform_0, window_bounds = array<i64: 80, 1024>}, {pipeline_mode = #tpu.pipeline_mode<synchronous>, transform_indices = @transform_1, window_bounds = array<i64: 8, 80>}, {pipeline_mode = #tpu.pipeline_mode<synchronous>, transform_indices = @transform_2, window_bounds = array<i64: 256, 128>}, {pipeline_mode = #tpu.pipeline_mode<synchronous>, transform_indices = @transform_3, window_bounds = array<i64: 1, 16>}, {transform_indices = @transform_4, window_bounds = array<i64: 1, 1, 10>}]} {
    %c0 = arith.constant 0 : index
    %c0_0 = arith.constant 0 : index
    %0 = vector.load %arg2[%c0, %c0_0] : memref<8x80xf32, #tpu.memory_space<vmem>>, vector<8x80xf32>
    %c0_1 = arith.constant 0 : index
    %c0_2 = arith.constant 0 : index
    %1 = vector.load %arg1[%c0_1, %c0_2] : memref<80x1024xf32, #tpu.memory_space<vmem>>, vector<80x1024xf32>
    %cst = arith.constant dense<0.000000e+00> : vector<8x1024xf32>
    %2 = tpu.matmul %0, %1, %cst {dimension_numbers = #tpu.dot_dimension_numbers<[1], [0], [0], [1], [0, 0, 1, 1], [], []>} : vector<8x80xf32>, vector<80x1024xf32>, vector<8x1024xf32> -> vector<8x1024xf32>
    %3 = vector.extract_strided_slice %2 {offsets = [0, 0], sizes = [8, 256], strides = [1, 1]} : vector<8x1024xf32> to vector<8x256xf32>
    %4 = vector.extract_strided_slice %2 {offsets = [0, 256], sizes = [8, 256], strides = [1, 1]} : vector<8x1024xf32> to vector<8x256xf32>
    %5 = arith.maximumf %3, %4 : vector<8x256xf32>
    %6 = vector.extract_strided_slice %2 {offsets = [0, 512], sizes = [8, 256], strides = [1, 1]} : vector<8x1024xf32> to vector<8x256xf32>
    %7 = arith.maximumf %5, %6 : vector<8x256xf32>
    %8 = vector.extract_strided_slice %2 {offsets = [0, 768], sizes = [8, 256], strides = [1, 1]} : vector<8x1024xf32> to vector<8x256xf32>
    %9 = arith.maximumf %7, %8 : vector<8x256xf32>
    %cst_3 = arith.constant 0.000000e+00 : f32
    %10 = vector.broadcast %cst_3 : f32 to vector<8x256xf32>
    %11 = arith.maximumf %9, %10 : vector<8x256xf32>
    %c0_4 = arith.constant 0 : index
    %c0_5 = arith.constant 0 : index
    %12 = vector.load %arg3[%c0_4, %c0_5] : memref<256x128xf32, #tpu.memory_space<vmem>>, vector<256x128xf32>
    %cst_6 = arith.constant dense<0.000000e+00> : vector<8x128xf32>
    %13 = tpu.matmul %11, %12, %cst_6 {dimension_numbers = #tpu.dot_dimension_numbers<[1], [0], [0], [1], [0, 0, 1, 1], [], []>} : vector<8x256xf32>, vector<256x128xf32>, vector<8x128xf32> -> vector<8x128xf32>
    %c0_7 = arith.constant 0 : index
    %c0_8 = arith.constant 0 : index
    %14 = vector.load %arg4[%c0_7, %c0_8] : memref<1x16xf32, #tpu.memory_space<vmem>>, vector<1x16xf32>
    %15 = vector.extract_strided_slice %13 {offsets = [0, 0], sizes = [1, 16], strides = [1, 1]} : vector<8x128xf32> to vector<1x16xf32>
    %16 = arith.addf %14, %15 : vector<1x16xf32>
    %17 = vector.extract_strided_slice %13 {offsets = [1, 16], sizes = [1, 16], strides = [1, 1]} : vector<8x128xf32> to vector<1x16xf32>
    %18 = arith.addf %16, %17 : vector<1x16xf32>
    %19 = vector.extract_strided_slice %13 {offsets = [2, 32], sizes = [1, 16], strides = [1, 1]} : vector<8x128xf32> to vector<1x16xf32>
    %20 = arith.addf %18, %19 : vector<1x16xf32>
    %21 = vector.extract_strided_slice %13 {offsets = [3, 48], sizes = [1, 16], strides = [1, 1]} : vector<8x128xf32> to vector<1x16xf32>
    %22 = arith.addf %20, %21 : vector<1x16xf32>
    %23 = vector.extract_strided_slice %13 {offsets = [4, 64], sizes = [1, 16], strides = [1, 1]} : vector<8x128xf32> to vector<1x16xf32>
    %24 = arith.addf %22, %23 : vector<1x16xf32>
    %25 = vector.extract_strided_slice %13 {offsets = [5, 80], sizes = [1, 16], strides = [1, 1]} : vector<8x128xf32> to vector<1x16xf32>
    %26 = arith.addf %24, %25 : vector<1x16xf32>
    %27 = vector.extract_strided_slice %13 {offsets = [6, 96], sizes = [1, 16], strides = [1, 1]} : vector<8x128xf32> to vector<1x16xf32>
    %28 = arith.addf %26, %27 : vector<1x16xf32>
    %29 = vector.extract_strided_slice %13 {offsets = [7, 112], sizes = [1, 16], strides = [1, 1]} : vector<8x128xf32> to vector<1x16xf32>
    %30 = arith.addf %28, %29 : vector<1x16xf32>
    %31 = vector.extract_strided_slice %30 {offsets = [0, 0], sizes = [1, 10], strides = [1, 1]} : vector<1x16xf32> to vector<1x10xf32>
    %c0_9 = arith.constant 0 : index
    %c0_10 = arith.constant 0 : index
    %c0_11 = arith.constant 0 : index
    %32 = vector.load %arg5[%c0_9, %c0_10, %c0_11] : memref<1x1x10xf32, #tpu.memory_space<vmem>>, vector<1x1x10xf32>
    %33 = vector.shape_cast %32 : vector<1x1x10xf32> to vector<1x10xf32>
    %34 = vector.shape_cast %31 : vector<1x10xf32> to vector<1x1x10xf32>
    tpu.vector_store %arg5[%c0_9, %c0_10, %c0_11], %34 {strides = array<i32>} : memref<1x1x10xf32, #tpu.memory_space<vmem>>, vector<1x1x10xf32>,
    return
  }
  func.func @transform_0(%arg0: i32) -> (i32, i32) {
    %c0_i32 = arith.constant 0 : i32
    %c0_i32_0 = arith.constant 0 : i32
    return %c0_i32, %arg0 : i32, i32
  }
  func.func @transform_1(%arg0: i32) -> (i32, i32) {
    %c0_i32 = arith.constant 0 : i32
    %c0_i32_0 = arith.constant 0 : i32
    %c0_i32_1 = arith.constant 0 : i32
    return %c0_i32, %c0_i32_0 : i32, i32
  }
  func.func @transform_2(%arg0: i32) -> (i32, i32) {
    %c0_i32 = arith.constant 0 : i32
    %c0_i32_0 = arith.constant 0 : i32
    %c0_i32_1 = arith.constant 0 : i32
    return %c0_i32, %c0_i32_0 : i32, i32
  }
  func.func @transform_3(%arg0: i32) -> (i32, i32) {
    %c0_i32 = arith.constant 0 : i32
    %c0_i32_0 = arith.constant 0 : i32
    %c0_i32_1 = arith.constant 0 : i32
    return %c0_i32, %c0_i32_0 : i32, i32
  }
  func.func @transform_4(%arg0: i32) -> (i32, i32, i32) {
    %c0_i32 = arith.constant 0 : i32
    %c0_i32_0 = arith.constant 0 : i32
    %c0_i32_1 = arith.constant 0 : i32
    return %arg0, %c0_i32, %c0_i32_0 : i32, i32, i32
  }
}

</mosaic_0001>

<llo_original>
// kernel: conv_layer_net_forward.1
$region0: #{conv_layer_net_forward.1}
  #allocation0 [shape = 'u32[]', space=smem, size = 0x4, offset = 0x4, fixed_abs, tag = 'smem constant byte address 0x4 - core index']
  #allocation1 [shape = 'u32[72,128]{1,0:T(1,128)}', space=vmem, size = 0x9000, scoped, tag = 'internal scratch']
  %s0 = inlined_call_operand.vmem [shape: f32[80,2048], index: 0, kind: input, shape index: {}]
  %s1 = inlined_call_operand.vmem [shape: f32[8,80], index: 1, kind: input, shape index: {}]
  %s2 = inlined_call_operand.vmem [shape: f32[256,128], index: 2, kind: input, shape index: {}]
  %s3 = inlined_call_operand.vmem [shape: f32[1,16], index: 3, kind: input, shape index: {}]
  %s4 = inlined_call_operand.hbm [shape: f32[2,1,10], index: 4, kind: output, shape index: {}]
  %s5 = sld [smem:[#allocation0]]
  $region72: #{conv_layer_net_forward.1} parent=0
    _
  %s7 = ssub.s32 1, %s5
  %s8 = scalar_select 0, %s7, %s5
  $region1: #{conv_layer_net_forward.1} parent=0
    #allocation2 [shape = 'u8[655360]{0}', space=vmem, size = 0xa0000, scoped, tag = 'input window, operand 0']
    #allocation3 [shape = 'u8[1024]{0}', space=vmem, size = 0x400, scoped, tag = 'output window, operand 0']
    #allocation4 [shape = 's32[2]{0}', space=sflag, size = 0x8, scoped, tag = 'scoped memory for conv_layer_net_forward.1']
    %9 = vsyncpa [#allocation4], 0
    %s10 = scalar_lea.sflag [#allocation4], 1
    %11 = vsyncpa %s10, 0
    loop: start=0, step=1, limit=4
    $region2: #{conv_layer_net_forward.1} parent=1 // loop_pre_header
      _
    $region3: #{conv_layer_net_forward.1} parent=1 // loop_header
      %s13 = sphi 0, %s17
      %p14 = scmp.ge.s32.totalorder %s13, 4
      %s23 = sphi 0, %s25
      %s26 = sphi 0, %s23
      %s27 = sphi 0, %s26
      %s43 = sphi 0, %s27
      %s47 = sphi 0, %s47
      %s49 = sphi 0, %s47
      %s50 = sphi 0, %s49
      %s64 = sphi 0, %s50
      %s68 = sphi 0, %s68
      %s70 = sphi 0, %s68
      %s71 = sphi 0, %s70
      %s85 = sphi 0, %s71
      %s89 = sphi 0, %s89
      %s91 = sphi 0, %s89
      %s92 = sphi 0, %s91
      %s106 = sphi 0, %s92
      %s112 = sphi 0, %s114
      %s115 = sphi 0, %s112
      %s116 = sphi 0, %s115
      %s132 = sphi 0, %s116
    $region4: #{conv_layer_net_forward.1} parent=1 // loop_header_branch
      %16 = sbr.rel (%p14) target = $region8
    $region5: #{conv_layer_net_forward.1} parent=1 // loop_body
      %s18 = ssub.s32 %s13, 1
      %s19 = ssub.s32 %s13, 2
      %s20 = sadd.s32 %s13, 1
      %s21 = ssub.s32 %s13, %s20
      %p22 = scmp.eq.s32.totalorder %s21, 0
      %s24 = sadd.s32 %s23, 1
      %s25 = scalar_select %p22, %s23, %s24
      %p28 = pneg %p22
      %p29 = scmp.eq.s32.totalorder %s13, 1
      %p30 = por %p28, %p29
      %p31 = scmp.ne.s32.totalorder %s23, %s26
      %p32 = scmp.eq.s32.totalorder %s13, 0
      %p33 = por %p31, %p32
      %p34 = scmp.ne.s32.totalorder %s23, %s26
      %p35 = scmp.eq.s32.totalorder %s18, 1
      %p36 = por %p34, %p35
      %p37 = scmp.ne.s32.totalorder %s26, %s27
      %p38 = scmp.eq.s32.totalorder %s18, 0
      %p39 = por %p37, %p38
      %p40 = scmp.ne.s32.totalorder %s26, %s27
      %p41 = scmp.eq.s32.totalorder %s19, 1
      %p42 = por %p40, %p41
      %p44 = scmp.ne.s32.totalorder %s27, %s43
      %p45 = scmp.eq.s32.totalorder %s19, 0
      %p46 = por %p44, %p45
      %s48 = sadd.s32 %s47, 1
      %p51 = scmp.eq.s32.totalorder %s13, 1
      %p52 = scmp.ne.s32.totalorder %s47, %s49
      %p53 = scmp.eq.s32.totalorder %s13, 0
      %p54 = por %p52, %p53
      %p55 = scmp.ne.s32.totalorder %s47, %s49
      %p56 = scmp.eq.s32.totalorder %s18, 1
      %p57 = por %p55, %p56
      %p58 = scmp.ne.s32.totalorder %s49, %s50
      %p59 = scmp.eq.s32.totalorder %s18, 0
      %p60 = por %p58, %p59
      %p61 = scmp.ne.s32.totalorder %s49, %s50
      %p62 = scmp.eq.s32.totalorder %s19, 1
      %p63 = por %p61, %p62
      %p65 = scmp.ne.s32.totalorder %s50, %s64
      %p66 = scmp.eq.s32.totalorder %s19, 0
      %p67 = por %p65, %p66
      %s69 = sadd.s32 %s68, 1
      %p72 = scmp.eq.s32.totalorder %s13, 1
      %p73 = scmp.ne.s32.totalorder %s68, %s70
      %p74 = scmp.eq.s32.totalorder %s13, 0
      %p75 = por %p73, %p74
      %p76 = scmp.ne.s32.totalorder %s68, %s70
      %p77 = scmp.eq.s32.totalorder %s18, 1
      %p78 = por %p76, %p77
      %p79 = scmp.ne.s32.totalorder %s70, %s71
      %p80 = scmp.eq.s32.totalorder %s18, 0
      %p81 = por %p79, %p80
      %p82 = scmp.ne.s32.totalorder %s70, %s71
      %p83 = scmp.eq.s32.totalorder %s19, 1
      %p84 = por %p82, %p83
      %p86 = scmp.ne.s32.totalorder %s71, %s85
      %p87 = scmp.eq.s32.totalorder %s19, 0
      %p88 = por %p86, %p87
      %s90 = sadd.s32 %s89, 1
      %p93 = scmp.eq.s32.totalorder %s13, 1
      %p94 = scmp.ne.s32.totalorder %s89, %s91
      %p95 = scmp.eq.s32.totalorder %s13, 0
      %p96 = por %p94, %p95
      %p97 = scmp.ne.s32.totalorder %s89, %s91
      %p98 = scmp.eq.s32.totalorder %s18, 1
      %p99 = por %p97, %p98
      %p100 = scmp.ne.s32.totalorder %s91, %s92
      %p101 = scmp.eq.s32.totalorder %s18, 0
      %p102 = por %p100, %p101
      %p103 = scmp.ne.s32.totalorder %s91, %s92
      %p104 = scmp.eq.s32.totalorder %s19, 1
      %p105 = por %p103, %p104
      %p107 = scmp.ne.s32.totalorder %s92, %s106
      %p108 = scmp.eq.s32.totalorder %s19, 0
      %p109 = por %p107, %p108
      %s110 = ssub.s32 %s13, %s20
      %p111 = scmp.eq.s32.totalorder %s110, 0
      %s113 = sadd.s32 %s112, 1
      %s114 = scalar_select %p111, %s112, %s113
      %p117 = pneg %p111
      %p118 = scmp.eq.s32.totalorder %s13, 1
      %p119 = por %p117, %p118
      %p120 = scmp.ne.s32.totalorder %s112, %s115
      %p121 = scmp.eq.s32.totalorder %s13, 0
      %p122 = por %p120, %p121
      %p123 = scmp.ne.s32.totalorder %s112, %s115
      %p124 = scmp.eq.s32.totalorder %s18, 1
      %p125 = por %p123, %p124
      %p126 = scmp.ne.s32.totalorder %s115, %s116
      %p127 = scmp.eq.s32.totalorder %s18, 0
      %p128 = por %p126, %p127
      %p129 = scmp.ne.s32.totalorder %s115, %s116
      %p130 = scmp.eq.s32.totalorder %s19, 1
      %p131 = por %p129, %p130
      %p133 = scmp.ne.s32.totalorder %s116, %s132
      %p134 = scmp.eq.s32.totalorder %s19, 0
      %p135 = por %p133, %p134
      %p136 = scmp.le.s32.totalorder 1, %s13
      %p137 = scmp.lt.s32.totalorder %s13, 3
      %p138 = pnand %p136, %p137
      %p139 = pneg %p138
      // Predicated region
      $region9: #{conv_layer_net_forward.1} parent=5 // pred_check
        _
      $region10: #{conv_layer_net_forward.1} parent=5 // pred_check_branch
        %141 = sbr.rel (%p138) target = $region12
      $region11: #{conv_layer_net_forward.1} parent=5 // pred_region
        %s142 = ssub.s32 %s13, 1
        // Predicated region
        $region13: #{conv_layer_net_forward.1} parent=11 // pred_check
          %p143 = pneg %p60
        $region14: #{conv_layer_net_forward.1} parent=11 // pred_check_branch
          %145 = sbr.rel (%p143) target = $region16
        $region15: #{conv_layer_net_forward.1} parent=11 // pred_region
          _
        $region16: #{conv_layer_net_forward.1} parent=11 // pred_fallthru
          _
        // Predicated region
        $region17: #{conv_layer_net_forward.1} parent=11 // pred_check
          %p146 = pneg %p81
        $region18: #{conv_layer_net_forward.1} parent=11 // pred_check_branch
          %148 = sbr.rel (%p146) target = $region20
        $region19: #{conv_layer_net_forward.1} parent=11 // pred_region
          _
        $region20: #{conv_layer_net_forward.1} parent=11 // pred_fallthru
          _
        // Predicated region
        $region21: #{conv_layer_net_forward.1} parent=11 // pred_check
          %p149 = pneg %p102
        $region22: #{conv_layer_net_forward.1} parent=11 // pred_check_branch
          %151 = sbr.rel (%p149) target = $region24
        $region23: #{conv_layer_net_forward.1} parent=11 // pred_region
          _
        $region24: #{conv_layer_net_forward.1} parent=11 // pred_fallthru
          _
      $region12: #{conv_layer_net_forward.1} parent=5 // pred_fallthru
        _
      %p152 = scmp.lt.s32.totalorder %s13, 2
      // Predicated region
      $region25: #{conv_layer_net_forward.1} parent=5 // pred_check
        %p153 = pneg %p152
      $region26: #{conv_layer_net_forward.1} parent=5 // pred_check_branch
        %155 = sbr.rel (%p153) target = $region28
      $region27: #{conv_layer_net_forward.1} parent=5 // pred_region
        // Predicated region
        $region29: #{conv_layer_net_forward.1} parent=27 // pred_check
          %p156 = pneg %p33
        $region30: #{conv_layer_net_forward.1} parent=27 // pred_check_branch
          %158 = sbr.rel (%p156) target = $region32
        $region31: #{conv_layer_net_forward.1} parent=27 // pred_region
          %s159 = sand.u32 %s23, 1
          %s160 = sand.u32 %s23, 1
          %s161 = smul.addr %s160, 640
          %s162 = scalar_lea.vmem [#allocation2], %s161
          %s163 = smul.u32 8, %s13
          %s164 = smul.addr %s163, 8
          %s165 = scalar_lea.vmem %s0, %s164
          // Predicated region
          $region33: #{conv_layer_net_forward.1} parent=31 // pred_check
            _
          $region34: #{conv_layer_net_forward.1} parent=31 // pred_check_branch
            %167 = sbr.rel (0) target = $region36
          $region35: #{conv_layer_net_forward.1} parent=31 // pred_region
            // Predicated region
            $region37: #{conv_layer_net_forward.1} parent=35 // pred_check
              _
            $region38: #{conv_layer_net_forward.1} parent=35 // pred_check_branch
              %169 = sbr.rel (0) target = $region40
            $region39: #{conv_layer_net_forward.1} parent=35 // pred_region
              loop: start=0, step=1, limit=1
              $region41: #{conv_layer_net_forward.1} parent=39 // loop_pre_header
                _
              $region42: #{conv_layer_net_forward.1} parent=39 // loop_header
                %s171 = sphi 0, %s175
                %p172 = scmp.ge.s32.totalorder %s171, 1
                %s176 = sphi %s165, %s165
                %s177 = sphi %s162, %s162
              $region43: #{conv_layer_net_forward.1} parent=39 // loop_header_branch
                %174 = sbr.rel (%p172) target = $region47
              $region44: #{conv_layer_net_forward.1} parent=39 // loop_body
                %v178 = vld [vmem:[%s176] sm:$0xff]
                %179 = vst [vmem:[%s177] sm:$0xff] %v178
                %v180 = vld [vmem:[%s176 + $0x8] sm:$0xff]
                %181 = vst [vmem:[%s177 + $0x8] sm:$0xff] %v180
                %v182 = vld [vmem:[%s176 + $0x10] sm:$0xff]
                %183 = vst [vmem:[%s177 + $0x10] sm:$0xff] %v182
                %v184 = vld [vmem:[%s176 + $0x18] sm:$0xff]
                %185 = vst [vmem:[%s177 + $0x18] sm:$0xff] %v184
                %v186 = vld [vmem:[%s176 + $0x20] sm:$0xff]
                %187 = vst [vmem:[%s177 + $0x20] sm:$0xff] %v186
                %v188 = vld [vmem:[%s176 + $0x28] sm:$0xff]
                %189 = vst [vmem:[%s177 + $0x28] sm:$0xff] %v188
                %v190 = vld [vmem:[%s176 + $0x30] sm:$0xff]
                %191 = vst [vmem:[%s177 + $0x30] sm:$0xff] %v190
                %v192 = vld [vmem:[%s176 + $0x38] sm:$0xff]
                %193 = vst [vmem:[%s177 + $0x38] sm:$0xff] %v192
                %v194 = vld [vmem:[%s176 + $0x80] sm:$0xff]
                %195 = vst [vmem:[%s177 + $0x40] sm:$0xff] %v194
                %v196 = vld [vmem:[%s176 + $0x88] sm:$0xff]
                %197 = vst [vmem:[%s177 + $0x48] sm:$0xff] %v196
                %v198 = vld [vmem:[%s176 + $0x90] sm:$0xff]
                %199 = vst [vmem:[%s177 + $0x50] sm:$0xff] %v198
                %v200 = vld [vmem:[%s176 + $0x98] sm:$0xff]
                %201 = vst [vmem:[%s177 + $0x58] sm:$0xff] %v200
                %v202 = vld [vmem:[%s176 + $0xa0] sm:$0xff]
                %203 = vst [vmem:[%s177 + $0x60] sm:$0xff] %v202
                %v204 = vld [vmem:[%s176 + $0xa8] sm:$0xff]
                %205 = vst [vmem:[%s177 + $0x68] sm:$0xff] %v204
                %v206 = vld [vmem:[%s176 + $0xb0] sm:$0xff]
                %207 = vst [vmem:[%s177 + $0x70] sm:$0xff] %v206
                %v208 = vld [vmem:[%s176 + $0xb8] sm:$0xff]
                %209 = vst [vmem:[%s177 + $0x78] sm:$0xff] %v208
                %v210 = vld [vmem:[%s176 + $0x100] sm:$0xff]
                %211 = vst [vmem:[%s177 + $0x80] sm:$0xff] %v210
                %v212 = vld [vmem:[%s176 + $0x108] sm:$0xff]
                %213 = vst [vmem:[%s177 + $0x88] sm:$0xff] %v212
                %v214 = vld [vmem:[%s176 + $0x110] sm:$0xff]
                %215 = vst [vmem:[%s177 + $0x90] sm:$0xff] %v214
                %v216 = vld [vmem:[%s176 + $0x118] sm:$0xff]
                %217 = vst [vmem:[%s177 + $0x98] sm:$0xff] %v216
                %v218 = vld [vmem:[%s176 + $0x120] sm:$0xff]
                %219 = vst [vmem:[%s177 + $0xa0] sm:$0xff] %v218
                %v220 = vld [vmem:[%s176 + $0x128] sm:$0xff]
                %221 = vst [vmem:[%s177 + $0xa8] sm:$0xff] %v220
                %v222 = vld [vmem:[%s176 + $0x130] sm:$0xff]
                %223 = vst [vmem:[%s177 + $0xb0] sm:$0xff] %v222
                %v224 = vld [vmem:[%s176 + $0x138] sm:$0xff]
                %225 = vst [vmem:[%s177 + $0xb8] sm:$0xff] %v224
                %v226 = vld [vmem:[%s176 + $0x180] sm:$0xff]
                %227 = vst [vmem:[%s177 + $0xc0] sm:$0xff] %v226
                %v228 = vld [vmem:[%s176 + $0x188] sm:$0xff]
                %229 = vst [vmem:[%s177 + $0xc8] sm:$0xff] %v228
                %v230 = vld [vmem:[%s176 + $0x190] sm:$0xff]
                %231 = vst [vmem:[%s177 + $0xd0] sm:$0xff] %v230
                %v232 = vld [vmem:[%s176 + $0x198] sm:$0xff]
                %233 = vst [vmem:[%s177 + $0xd8] sm:$0xff] %v232
                %v234 = vld [vmem:[%s176 + $0x1a0] sm:$0xff]
                %235 = vst [vmem:[%s177 + $0xe0] sm:$0xff] %v234
                %v236 = vld [vmem:[%s176 + $0x1a8] sm:$0xff]
                %237 = vst [vmem:[%s177 + $0xe8] sm:$0xff] %v236
                %v238 = vld [vmem:[%s176 + $0x1b0] sm:$0xff]
                %239 = vst [vmem:[%s177 + $0xf0] sm:$0xff] %v238
                %v240 = vld [vmem:[%s176 + $0x1b8] sm:$0xff]
                %241 = vst [vmem:[%s177 + $0xf8] sm:$0xff] %v240
                %v242 = vld [vmem:[%s176 + $0x200] sm:$0xff]
                %243 = vst [vmem:[%s177 + $0x100] sm:$0xff] %v242
                %v244 = vld [vmem:[%s176 + $0x208] sm:$0xff]
                %245 = vst [vmem:[%s177 + $0x108] sm:$0xff] %v244
                %v246 = vld [vmem:[%s176 + $0x210] sm:$0xff]
                %247 = vst [vmem:[%s177 + $0x110] sm:$0xff] %v246
                %v248 = vld [vmem:[%s176 + $0x218] sm:$0xff]
                %249 = vst [vmem:[%s177 + $0x118] sm:$0xff] %v248
                %v250 = vld [vmem:[%s176 + $0x220] sm:$0xff]
                %251 = vst [vmem:[%s177 + $0x120] sm:$0xff] %v250
                %v252 = vld [vmem:[%s176 + $0x228] sm:$0xff]
                %253 = vst [vmem:[%s177 + $0x128] sm:$0xff] %v252
                %v254 = vld [vmem:[%s176 + $0x230] sm:$0xff]
                %255 = vst [vmem:[%s177 + $0x130] sm:$0xff] %v254
                %v256 = vld [vmem:[%s176 + $0x238] sm:$0xff]
                %257 = vst [vmem:[%s177 + $0x138] sm:$0xff] %v256
                %v258 = vld [vmem:[%s176 + $0x280] sm:$0xff]
                %259 = vst [vmem:[%s177 + $0x140] sm:$0xff] %v258
                %v260 = vld [vmem:[%s176 + $0x288] sm:$0xff]
                %261 = vst [vmem:[%s177 + $0x148] sm:$0xff] %v260
                %v262 = vld [vmem:[%s176 + $0x290] sm:$0xff]
                %263 = vst [vmem:[%s177 + $0x150] sm:$0xff] %v262
                %v264 = vld [vmem:[%s176 + $0x298] sm:$0xff]
                %265 = vst [vmem:[%s177 + $0x158] sm:$0xff] %v264
                %v266 = vld [vmem:[%s176 + $0x2a0] sm:$0xff]
                %267 = vst [vmem:[%s177 + $0x160] sm:$0xff] %v266
                %v268 = vld [vmem:[%s176 + $0x2a8] sm:$0xff]
                %269 = vst [vmem:[%s177 + $0x168] sm:$0xff] %v268
                %v270 = vld [vmem:[%s176 + $0x2b0] sm:$0xff]
                %271 = vst [vmem:[%s177 + $0x170] sm:$0xff] %v270
                %v272 = vld [vmem:[%s176 + $0x2b8] sm:$0xff]
                %273 = vst [vmem:[%s177 + $0x178] sm:$0xff] %v272
                %v274 = vld [vmem:[%s176 + $0x300] sm:$0xff]
                %275 = vst [vmem:[%s177 + $0x180] sm:$0xff] %v274
                %v276 = vld [vmem:[%s176 + $0x308] sm:$0xff]
                %277 = vst [vmem:[%s177 + $0x188] sm:$0xff] %v276
                %v278 = vld [vmem:[%s176 + $0x310] sm:$0xff]
                %279 = vst [vmem:[%s177 + $0x190] sm:$0xff] %v278
                %v280 = vld [vmem:[%s176 + $0x318] sm:$0xff]
                %281 = vst [vmem:[%s177 + $0x198] sm:$0xff] %v280
                %v282 = vld [vmem:[%s176 + $0x320] sm:$0xff]
                %283 = vst [vmem:[%s177 + $0x1a0] sm:$0xff] %v282
                %v284 = vld [vmem:[%s176 + $0x328] sm:$0xff]
                %285 = vst [vmem:[%s177 + $0x1a8] sm:$0xff] %v284
                %v286 = vld [vmem:[%s176 + $0x330] sm:$0xff]
                %287 = vst [vmem:[%s177 + $0x1b0] sm:$0xff] %v286
                %v288 = vld [vmem:[%s176 + $0x338] sm:$0xff]
                %289 = vst [vmem:[%s177 + $0x1b8] sm:$0xff] %v288
                %v290 = vld [vmem:[%s176 + $0x380] sm:$0xff]
                %291 = vst [vmem:[%s177 + $0x1c0] sm:$0xff] %v290
                %v292 = vld [vmem:[%s176 + $0x388] sm:$0xff]
                %293 = vst [vmem:[%s177 + $0x1c8] sm:$0xff] %v292
                %v294 = vld [vmem:[%s176 + $0x390] sm:$0xff]
                %295 = vst [vmem:[%s177 + $0x1d0] sm:$0xff] %v294
                %v296 = vld [vmem:[%s176 + $0x398] sm:$0xff]
                %297 = vst [vmem:[%s177 + $0x1d8] sm:$0xff] %v296
                %v298 = vld [vmem:[%s176 + $0x3a0] sm:$0xff]
                %299 = vst [vmem:[%s177 + $0x1e0] sm:$0xff] %v298
                %v300 = vld [vmem:[%s176 + $0x3a8] sm:$0xff]
                %301 = vst [vmem:[%s177 + $0x1e8] sm:$0xff] %v300
                %v302 = vld [vmem:[%s176 + $0x3b0] sm:$0xff]
                %303 = vst [vmem:[%s177 + $0x1f0] sm:$0xff] %v302
                %v304 = vld [vmem:[%s176 + $0x3b8] sm:$0xff]
                %305 = vst [vmem:[%s177 + $0x1f8] sm:$0xff] %v304
                %v306 = vld [vmem:[%s176 + $0x400] sm:$0xff]
                %307 = vst [vmem:[%s177 + $0x200] sm:$0xff] %v306
                %v308 = vld [vmem:[%s176 + $0x408] sm:$0xff]
                %309 = vst [vmem:[%s177 + $0x208] sm:$0xff] %v308
                %v310 = vld [vmem:[%s176 + $0x410] sm:$0xff]
                %311 = vst [vmem:[%s177 + $0x210] sm:$0xff] %v310
                %v312 = vld [vmem:[%s176 + $0x418] sm:$0xff]
                %313 = vst [vmem:[%s177 + $0x218] sm:$0xff] %v312
                %v314 = vld [vmem:[%s176 + $0x420] sm:$0xff]
                %315 = vst [vmem:[%s177 + $0x220] sm:$0xff] %v314
                %v316 = vld [vmem:[%s176 + $0x428] sm:$0xff]
                %317 = vst [vmem:[%s177 + $0x228] sm:$0xff] %v316
                %v318 = vld [vmem:[%s176 + $0x430] sm:$0xff]
                %319 = vst [vmem:[%s177 + $0x230] sm:$0xff] %v318
                %v320 = vld [vmem:[%s176 + $0x438] sm:$0xff]
                %321 = vst [vmem:[%s177 + $0x238] sm:$0xff] %v320
                %v322 = vld [vmem:[%s176 + $0x480] sm:$0xff]
                %323 = vst [vmem:[%s177 + $0x240] sm:$0xff] %v322
                %v324 = vld [vmem:[%s176 + $0x488] sm:$0xff]
                %325 = vst [vmem:[%s177 + $0x248] sm:$0xff] %v324
                %v326 = vld [vmem:[%s176 + $0x490] sm:$0xff]
                %327 = vst [vmem:[%s177 + $0x250] sm:$0xff] %v326
                %v328 = vld [vmem:[%s176 + $0x498] sm:$0xff]
                %329 = vst [vmem:[%s177 + $0x258] sm:$0xff] %v328
                %v330 = vld [vmem:[%s176 + $0x4a0] sm:$0xff]
                %331 = vst [vmem:[%s177 + $0x260] sm:$0xff] %v330
                %v332 = vld [vmem:[%s176 + $0x4a8] sm:$0xff]
                %333 = vst [vmem:[%s177 + $0x268] sm:$0xff] %v332
                %v334 = vld [vmem:[%s176 + $0x4b0] sm:$0xff]
                %335 = vst [vmem:[%s177 + $0x270] sm:$0xff] %v334
                %v336 = vld [vmem:[%s176 + $0x4b8] sm:$0xff]
                %337 = vst [vmem:[%s177 + $0x278] sm:$0xff] %v336
              $region45: #{conv_layer_net_forward.1} parent=39 // loop_footer
                %s175 = sadd.s32 1, %s171
              $region46: #{conv_layer_net_forward.1} parent=39 // loop_footer_branch
                %170 = sbr.rel target = $region42
              $region47: #{conv_layer_net_forward.1} parent=39 // loop_exit
                _
            $region40: #{conv_layer_net_forward.1} parent=35 // pred_fallthru
              _
            // Predicated region
            $region48: #{conv_layer_net_forward.1} parent=35 // pred_check
              _
            $region49: #{conv_layer_net_forward.1} parent=35 // pred_check_branch
              %339 = sbr.rel target = $region51
            $region50: #{conv_layer_net_forward.1} parent=35 // pred_region
              _
            $region51: #{conv_layer_net_forward.1} parent=35 // pred_fallthru
              _
          $region36: #{conv_layer_net_forward.1} parent=31 // pred_fallthru
            _
          %340 = vnop
        $region32: #{conv_layer_net_forward.1} parent=27 // pred_fallthru
          _
      $region28: #{conv_layer_net_forward.1} parent=5 // pred_fallthru
        _
      %p341 = scmp.le.s32.totalorder 1, %s13
      %p342 = scmp.lt.s32.totalorder %s13, 3
      %p343 = pnand %p341, %p342
      %p344 = pneg %p343
      // Predicated region
      $region52: #{conv_layer_net_forward.1} parent=5 // pred_check
        _
      $region53: #{conv_layer_net_forward.1} parent=5 // pred_check_branch
        %346 = sbr.rel (%p343) target = $region55
      $region54: #{conv_layer_net_forward.1} parent=5 // pred_region
        %s347 = ssub.s32 %s13, 1
        %s348 = sand.u32 %s26, 1
        %s349 = sand.u32 %s26, 1
        %s350 = smul.addr %s349, 640
        %s351 = scalar_lea.vmem [#allocation2], %s350
        // Predicated region
        $region56: #{conv_layer_net_forward.1} parent=54 // pred_check
          %p352 = pneg %p39
        $region57: #{conv_layer_net_forward.1} parent=54 // pred_check_branch
          %354 = sbr.rel (%p352) target = $region59
        $region58: #{conv_layer_net_forward.1} parent=54 // pred_region
          _
        $region59: #{conv_layer_net_forward.1} parent=54 // pred_fallthru
          _
        %s355 = sand.u32 %s26, 1
        %s356 = sand.u32 %s26, 1
        %s357 = smul.addr %s356, 640
        %s358 = scalar_lea.vmem [#allocation2], %s357
        %p359 = pneg %p39
        %p360 = pneg %p36
        %p361 = pneg %p60
        %p362 = pneg %p57
        %p363 = pneg %p81
        %p364 = pneg %p78
        %p365 = pneg %p102
        %p366 = pneg %p99
        %p367 = pneg %p128
        %p368 = pneg %p125
        %s369 = sand.u32 %s115, 1
        %s370 = scalar_lea.sflag [#allocation4], %s369
        %s371 = sand.u32 %s115, 1
        %s372 = scalar_lea.vmem [#allocation3], %s371
        %s373 = smul.u32 8, %s18
        %v374 = vld [vmem:[%s1] sm:$0xff]
        %v375 = vld [vmem:[%s351] sm:$0xff]
        %v376 = vld [vmem:[%s351 + $0x8] sm:$0xff]
        %v377 = vld [vmem:[%s351 + $0x10] sm:$0xff]
        %v378 = vld [vmem:[%s351 + $0x18] sm:$0xff]
        %v379 = vld [vmem:[%s351 + $0x20] sm:$0xff]
        %v380 = vld [vmem:[%s351 + $0x28] sm:$0xff]
        %v381 = vld [vmem:[%s351 + $0x30] sm:$0xff]
        %v382 = vld [vmem:[%s351 + $0x38] sm:$0xff]
        %v383 = vld [vmem:[%s351 + $0x40] sm:$0xff]
        %v384 = vld [vmem:[%s351 + $0x48] sm:$0xff]
        %v385 = vld [vmem:[%s351 + $0x50] sm:$0xff]
        %v386 = vld [vmem:[%s351 + $0x58] sm:$0xff]
        %v387 = vld [vmem:[%s351 + $0x60] sm:$0xff]
        %v388 = vld [vmem:[%s351 + $0x68] sm:$0xff]
        %v389 = vld [vmem:[%s351 + $0x70] sm:$0xff]
        %v390 = vld [vmem:[%s351 + $0x78] sm:$0xff]
        %v391 = vld [vmem:[%s351 + $0x80] sm:$0xff]
        %v392 = vld [vmem:[%s351 + $0x88] sm:$0xff]
        %v393 = vld [vmem:[%s351 + $0x90] sm:$0xff]
        %v394 = vld [vmem:[%s351 + $0x98] sm:$0xff]
        %v395 = vld [vmem:[%s351 + $0xa0] sm:$0xff]
        %v396 = vld [vmem:[%s351 + $0xa8] sm:$0xff]
        %v397 = vld [vmem:[%s351 + $0xb0] sm:$0xff]
        %v398 = vld [vmem:[%s351 + $0xb8] sm:$0xff]
        %v399 = vld [vmem:[%s351 + $0xc0] sm:$0xff]
        %v400 = vld [vmem:[%s351 + $0xc8] sm:$0xff]
        %v401 = vld [vmem:[%s351 + $0xd0] sm:$0xff]
        %v402 = vld [vmem:[%s351 + $0xd8] sm:$0xff]
        %v403 = vld [vmem:[%s351 + $0xe0] sm:$0xff]
        %v404 = vld [vmem:[%s351 + $0xe8] sm:$0xff]
        %v405 = vld [vmem:[%s351 + $0xf0] sm:$0xff]
        %v406 = vld [vmem:[%s351 + $0xf8] sm:$0xff]
        %v407 = vld [vmem:[%s351 + $0x100] sm:$0xff]
        %v408 = vld [vmem:[%s351 + $0x108] sm:$0xff]
        %v409 = vld [vmem:[%s351 + $0x110] sm:$0xff]
        %v410 = vld [vmem:[%s351 + $0x118] sm:$0xff]
        %v411 = vld [vmem:[%s351 + $0x120] sm:$0xff]
        %v412 = vld [vmem:[%s351 + $0x128] sm:$0xff]
        %v413 = vld [vmem:[%s351 + $0x130] sm:$0xff]
        %v414 = vld [vmem:[%s351 + $0x138] sm:$0xff]
        %v415 = vld [vmem:[%s351 + $0x140] sm:$0xff]
        %v416 = vld [vmem:[%s351 + $0x148] sm:$0xff]
        %v417 = vld [vmem:[%s351 + $0x150] sm:$0xff]
        %v418 = vld [vmem:[%s351 + $0x158] sm:$0xff]
        %v419 = vld [vmem:[%s351 + $0x160] sm:$0xff]
        %v420 = vld [vmem:[%s351 + $0x168] sm:$0xff]
        %v421 = vld [vmem:[%s351 + $0x170] sm:$0xff]
        %v422 = vld [vmem:[%s351 + $0x178] sm:$0xff]
        %v423 = vld [vmem:[%s351 + $0x180] sm:$0xff]
        %v424 = vld [vmem:[%s351 + $0x188] sm:$0xff]
        %v425 = vld [vmem:[%s351 + $0x190] sm:$0xff]
        %v426 = vld [vmem:[%s351 + $0x198] sm:$0xff]
        %v427 = vld [vmem:[%s351 + $0x1a0] sm:$0xff]
        %v428 = vld [vmem:[%s351 + $0x1a8] sm:$0xff]
        %v429 = vld [vmem:[%s351 + $0x1b0] sm:$0xff]
        %v430 = vld [vmem:[%s351 + $0x1b8] sm:$0xff]
        %v431 = vld [vmem:[%s351 + $0x1c0] sm:$0xff]
        %v432 = vld [vmem:[%s351 + $0x1c8] sm:$0xff]
        %v433 = vld [vmem:[%s351 + $0x1d0] sm:$0xff]
        %v434 = vld [vmem:[%s351 + $0x1d8] sm:$0xff]
        %v435 = vld [vmem:[%s351 + $0x1e0] sm:$0xff]
        %v436 = vld [vmem:[%s351 + $0x1e8] sm:$0xff]
        %v437 = vld [vmem:[%s351 + $0x1f0] sm:$0xff]
        %v438 = vld [vmem:[%s351 + $0x1f8] sm:$0xff]
        %v439 = vld [vmem:[%s351 + $0x200] sm:$0xff]
        %v440 = vld [vmem:[%s351 + $0x208] sm:$0xff]
        %v441 = vld [vmem:[%s351 + $0x210] sm:$0xff]
        %v442 = vld [vmem:[%s351 + $0x218] sm:$0xff]
        %v443 = vld [vmem:[%s351 + $0x220] sm:$0xff]
        %v444 = vld [vmem:[%s351 + $0x228] sm:$0xff]
        %v445 = vld [vmem:[%s351 + $0x230] sm:$0xff]
        %v446 = vld [vmem:[%s351 + $0x238] sm:$0xff]
        %v447 = vld [vmem:[%s351 + $0x240] sm:$0xff]
        %v448 = vld [vmem:[%s351 + $0x248] sm:$0xff]
        %v449 = vld [vmem:[%s351 + $0x250] sm:$0xff]
        %v450 = vld [vmem:[%s351 + $0x258] sm:$0xff]
        %v451 = vld [vmem:[%s351 + $0x260] sm:$0xff]
        %v452 = vld [vmem:[%s351 + $0x268] sm:$0xff]
        %v453 = vld [vmem:[%s351 + $0x270] sm:$0xff]
        %v454 = vld [vmem:[%s351 + $0x278] sm:$0xff]
        %vm455 = vcmask 654336
        %v457 = vsel %vm455, %v374, 0
        %459 = vmatpush.msra.mxu0 0.0
        %460 = vmatpush.msra.mxu0 0.0
        %461 = vmatpush.msra.mxu0 0.0
        %462 = vmatpush.msra.mxu0 0.0
        %463 = vmatpush.msra.mxu0 0.0
        %464 = vmatpush.msra.mxu0 0.0
        %465 = vmatpush.msra.mxu0 %v447
        %466 = vmatpush.msra.mxu0 %v439
        %467 = vmatpush.msra.mxu0 %v431
        %468 = vmatpush.msra.mxu0 %v423
        %469 = vmatpush.msra.mxu0 %v415
        %470 = vmatpush.msra.mxu0 %v407
        %471 = vmatpush.msra.mxu0 %v399
        %472 = vmatpush.msra.mxu0 %v391
        %473 = vmatpush.msra.mxu0 %v383
        %474 = vmatpush.msra.mxu0 %v375
        %475 = vmatmul.f32.gmra.mxu0 %v457
        %v476 = vpop.f32.mrf.mxu0
        %v477 = vadd.f32 0.0, %v476
        %478 = vdwg.mxu0
        %479 = vmatpush.msra.mxu0 0.0
        %480 = vmatpush.msra.mxu0 0.0
        %481 = vmatpush.msra.mxu0 0.0
        %482 = vmatpush.msra.mxu0 0.0
        %483 = vmatpush.msra.mxu0 0.0
        %484 = vmatpush.msra.mxu0 0.0
        %485 = vmatpush.msra.mxu0 %v448
        %486 = vmatpush.msra.mxu0 %v440
        %487 = vmatpush.msra.mxu0 %v432
        %488 = vmatpush.msra.mxu0 %v424
        %489 = vmatpush.msra.mxu0 %v416
        %490 = vmatpush.msra.mxu0 %v408
        %491 = vmatpush.msra.mxu0 %v400
        %492 = vmatpush.msra.mxu0 %v392
        %493 = vmatpush.msra.mxu0 %v384
        %494 = vmatpush.msra.mxu0 %v376
        %495 = vmatmul.f32.gmra.mxu0 %v457
        %v496 = vpop.f32.mrf.mxu0
        %v497 = vadd.f32 0.0, %v496
        %498 = vdwg.mxu0
        %499 = vmatpush.msra.mxu0 0.0
        %500 = vmatpush.msra.mxu0 0.0
        %501 = vmatpush.msra.mxu0 0.0
        %502 = vmatpush.msra.mxu0 0.0
        %503 = vmatpush.msra.mxu0 0.0
        %504 = vmatpush.msra.mxu0 0.0
        %505 = vmatpush.msra.mxu0 %v449
        %506 = vmatpush.msra.mxu0 %v441
        %507 = vmatpush.msra.mxu0 %v433
        %508 = vmatpush.msra.mxu0 %v425
        %509 = vmatpush.msra.mxu0 %v417
        %510 = vmatpush.msra.mxu0 %v409
        %511 = vmatpush.msra.mxu0 %v401
        %512 = vmatpush.msra.mxu0 %v393
        %513 = vmatpush.msra.mxu0 %v385
        %514 = vmatpush.msra.mxu0 %v377
        %515 = vmatmul.f32.gmra.mxu0 %v457
        %v516 = vpop.f32.mrf.mxu0
        %v517 = vadd.f32 0.0, %v516
        %518 = vdwg.mxu0
        %519 = vmatpush.msra.mxu0 0.0
        %520 = vmatpush.msra.mxu0 0.0
        %521 = vmatpush.msra.mxu0 0.0
        %522 = vmatpush.msra.mxu0 0.0
        %523 = vmatpush.msra.mxu0 0.0
        %524 = vmatpush.msra.mxu0 0.0
        %525 = vmatpush.msra.mxu0 %v450
        %526 = vmatpush.msra.mxu0 %v442
        %527 = vmatpush.msra.mxu0 %v434
        %528 = vmatpush.msra.mxu0 %v426
        %529 = vmatpush.msra.mxu0 %v418
        %530 = vmatpush.msra.mxu0 %v410
        %531 = vmatpush.msra.mxu0 %v402
        %532 = vmatpush.msra.mxu0 %v394
        %533 = vmatpush.msra.mxu0 %v386
        %534 = vmatpush.msra.mxu0 %v378
        %535 = vmatmul.f32.gmra.mxu0 %v457
        %v536 = vpop.f32.mrf.mxu0
        %v537 = vadd.f32 0.0, %v536
        %538 = vdwg.mxu0
        %539 = vmatpush.msra.mxu0 0.0
        %540 = vmatpush.msra.mxu0 0.0
        %541 = vmatpush.msra.mxu0 0.0
        %542 = vmatpush.msra.mxu0 0.0
        %543 = vmatpush.msra.mxu0 0.0
        %544 = vmatpush.msra.mxu0 0.0
        %545 = vmatpush.msra.mxu0 %v451
        %546 = vmatpush.msra.mxu0 %v443
        %547 = vmatpush.msra.mxu0 %v435
        %548 = vmatpush.msra.mxu0 %v427
        %549 = vmatpush.msra.mxu0 %v419
        %550 = vmatpush.msra.mxu0 %v411
        %551 = vmatpush.msra.mxu0 %v403
        %552 = vmatpush.msra.mxu0 %v395
        %553 = vmatpush.msra.mxu0 %v387
        %554 = vmatpush.msra.mxu0 %v379
        %555 = vmatmul.f32.gmra.mxu0 %v457
        %v556 = vpop.f32.mrf.mxu0
        %v557 = vadd.f32 0.0, %v556
        %558 = vdwg.mxu0
        %559 = vmatpush.msra.mxu0 0.0
        %560 = vmatpush.msra.mxu0 0.0
        %561 = vmatpush.msra.mxu0 0.0
        %562 = vmatpush.msra.mxu0 0.0
        %563 = vmatpush.msra.mxu0 0.0
        %564 = vmatpush.msra.mxu0 0.0
        %565 = vmatpush.msra.mxu0 %v452
        %566 = vmatpush.msra.mxu0 %v444
        %567 = vmatpush.msra.mxu0 %v436
        %568 = vmatpush.msra.mxu0 %v428
        %569 = vmatpush.msra.mxu0 %v420
        %570 = vmatpush.msra.mxu0 %v412
        %571 = vmatpush.msra.mxu0 %v404
        %572 = vmatpush.msra.mxu0 %v396
        %573 = vmatpush.msra.mxu0 %v388
        %574 = vmatpush.msra.mxu0 %v380
        %575 = vmatmul.f32.gmra.mxu0 %v457
        %v576 = vpop.f32.mrf.mxu0
        %v577 = vadd.f32 0.0, %v576
        %578 = vdwg.mxu0
        %579 = vmatpush.msra.mxu0 0.0
        %580 = vmatpush.msra.mxu0 0.0
        %581 = vmatpush.msra.mxu0 0.0
        %582 = vmatpush.msra.mxu0 0.0
        %583 = vmatpush.msra.mxu0 0.0
        %584 = vmatpush.msra.mxu0 0.0
        %585 = vmatpush.msra.mxu0 %v453
        %586 = vmatpush.msra.mxu0 %v445
        %587 = vmatpush.msra.mxu0 %v437
        %588 = vmatpush.msra.mxu0 %v429
        %589 = vmatpush.msra.mxu0 %v421
        %590 = vmatpush.msra.mxu0 %v413
        %591 = vmatpush.msra.mxu0 %v405
        %592 = vmatpush.msra.mxu0 %v397
        %593 = vmatpush.msra.mxu0 %v389
        %594 = vmatpush.msra.mxu0 %v381
        %595 = vmatmul.f32.gmra.mxu0 %v457
        %v596 = vpop.f32.mrf.mxu0
        %v597 = vadd.f32 0.0, %v596
        %598 = vdwg.mxu0
        %599 = vmatpush.msra.mxu0 0.0
        %600 = vmatpush.msra.mxu0 0.0
        %601 = vmatpush.msra.mxu0 0.0
        %602 = vmatpush.msra.mxu0 0.0
        %603 = vmatpush.msra.mxu0 0.0
        %604 = vmatpush.msra.mxu0 0.0
        %605 = vmatpush.msra.mxu0 %v454
        %606 = vmatpush.msra.mxu0 %v446
        %607 = vmatpush.msra.mxu0 %v438
        %608 = vmatpush.msra.mxu0 %v430
        %609 = vmatpush.msra.mxu0 %v422
        %610 = vmatpush.msra.mxu0 %v414
        %611 = vmatpush.msra.mxu0 %v406
        %612 = vmatpush.msra.mxu0 %v398
        %613 = vmatpush.msra.mxu0 %v390
        %614 = vmatpush.msra.mxu0 %v382
        %615 = vmatmul.f32.gmra.mxu0 %v457
        %v616 = vpop.f32.mrf.mxu0
        %v617 = vadd.f32 0.0, %v616
        %618 = vdwg.mxu0
        %v619 = vmax.f32 %v477, %v517
        %v620 = vmax.f32 %v497, %v537
        %v621 = vmax.f32 %v619, %v557
        %v622 = vmax.f32 %v620, %v577
        %v623 = vmax.f32 %v621, %v597
        %v624 = vmax.f32 %v622, %v617
        %v625 = vmax.f32 %v623, 0.0
        %v626 = vmax.f32 %v624, 0.0
        %v627 = vld [vmem:[%s2] sm:$0xff]
        %v628 = vld [vmem:[%s2 + $0x8] sm:$0xff]
        %v629 = vld [vmem:[%s2 + $0x10] sm:$0xff]
        %v630 = vld [vmem:[%s2 + $0x18] sm:$0xff]
        %v631 = vld [vmem:[%s2 + $0x20] sm:$0xff]
        %v632 = vld [vmem:[%s2 + $0x28] sm:$0xff]
        %v633 = vld [vmem:[%s2 + $0x30] sm:$0xff]
        %v634 = vld [vmem:[%s2 + $0x38] sm:$0xff]
        %v635 = vld [vmem:[%s2 + $0x40] sm:$0xff]
        %v636 = vld [vmem:[%s2 + $0x48] sm:$0xff]
        %v637 = vld [vmem:[%s2 + $0x50] sm:$0xff]
        %v638 = vld [vmem:[%s2 + $0x58] sm:$0xff]
        %v639 = vld [vmem:[%s2 + $0x60] sm:$0xff]
        %v640 = vld [vmem:[%s2 + $0x68] sm:$0xff]
        %v641 = vld [vmem:[%s2 + $0x70] sm:$0xff]
        %v642 = vld [vmem:[%s2 + $0x78] sm:$0xff]
        %v643 = vld [vmem:[%s2 + $0x80] sm:$0xff]
        %v644 = vld [vmem:[%s2 + $0x88] sm:$0xff]
        %v645 = vld [vmem:[%s2 + $0x90] sm:$0xff]
        %v646 = vld [vmem:[%s2 + $0x98] sm:$0xff]
        %v647 = vld [vmem:[%s2 + $0xa0] sm:$0xff]
        %v648 = vld [vmem:[%s2 + $0xa8] sm:$0xff]
        %v649 = vld [vmem:[%s2 + $0xb0] sm:$0xff]
        %v650 = vld [vmem:[%s2 + $0xb8] sm:$0xff]
        %v651 = vld [vmem:[%s2 + $0xc0] sm:$0xff]
        %v652 = vld [vmem:[%s2 + $0xc8] sm:$0xff]
        %v653 = vld [vmem:[%s2 + $0xd0] sm:$0xff]
        %v654 = vld [vmem:[%s2 + $0xd8] sm:$0xff]
        %v655 = vld [vmem:[%s2 + $0xe0] sm:$0xff]
        %v656 = vld [vmem:[%s2 + $0xe8] sm:$0xff]
        %v657 = vld [vmem:[%s2 + $0xf0] sm:$0xff]
        %v658 = vld [vmem:[%s2 + $0xf8] sm:$0xff]
        %659 = vmatpush.msra.mxu0 %v642
        %660 = vmatpush.msra.mxu0 %v641
        %661 = vmatpush.msra.mxu0 %v640
        %662 = vmatpush.msra.mxu0 %v639
        %663 = vmatpush.msra.mxu0 %v638
        %664 = vmatpush.msra.mxu0 %v637
        %665 = vmatpush.msra.mxu0 %v636
        %666 = vmatpush.msra.mxu0 %v635
        %667 = vmatpush.msra.mxu0 %v634
        %668 = vmatpush.msra.mxu0 %v633
        %669 = vmatpush.msra.mxu0 %v632
        %670 = vmatpush.msra.mxu0 %v631
        %671 = vmatpush.msra.mxu0 %v630
        %672 = vmatpush.msra.mxu0 %v629
        %673 = vmatpush.msra.mxu0 %v628
        %674 = vmatpush.msra.mxu0 %v627
        %675 = vmatmul.f32.gmra.mxu0 %v625
        %v676 = vpop.f32.mrf.mxu0
        %v677 = vadd.f32 0.0, %v676
        %678 = vdwg.mxu0
        %679 = vmatpush.msra.mxu0 %v658
        %680 = vmatpush.msra.mxu0 %v657
        %681 = vmatpush.msra.mxu0 %v656
        %682 = vmatpush.msra.mxu0 %v655
        %683 = vmatpush.msra.mxu0 %v654
        %684 = vmatpush.msra.mxu0 %v653
        %685 = vmatpush.msra.mxu0 %v652
        %686 = vmatpush.msra.mxu0 %v651
        %687 = vmatpush.msra.mxu0 %v650
        %688 = vmatpush.msra.mxu0 %v649
        %689 = vmatpush.msra.mxu0 %v648
        %690 = vmatpush.msra.mxu0 %v647
        %691 = vmatpush.msra.mxu0 %v646
        %692 = vmatpush.msra.mxu0 %v645
        %693 = vmatpush.msra.mxu0 %v644
        %694 = vmatpush.msra.mxu0 %v643
        %695 = vmatmul.f32.gmra.mxu0 %v626
        %v696 = vpop.f32.mrf.mxu0
        %v697 = vadd.f32 %v677, %v696
        %698 = vdwg.mxu0
        %v699 = vld [vmem:[%s3] sm:$0x1]
        %v700 = vadd.f32 %v699, %v697
        %702 = vst [vmem:[#allocation1] sm:$0xff] %v697
        %s703 = scalar_lea.vmem [#allocation1], 1
        %v704 = vld [vmem:[%s703] ss:$9 sm:$0xff]
        %705 = vrot.lane.b32.xlu0 %v704, 112
        %v706 = vpop.permute.xlu0 %705
        %v708 = vadd.f32 %v700, %v706
        %709 = vst [vmem:[#allocation1] sm:$0xff] %v697
        %s710 = scalar_lea.vmem [#allocation1], 2
        %v711 = vld [vmem:[%s710] ss:$9 sm:$0xff]
        %712 = vrot.lane.b32.xlu0 %v711, 96
        %v713 = vpop.permute.xlu0 %712
        %v715 = vadd.f32 %v708, %v713
        %716 = vst [vmem:[#allocation1] sm:$0xff] %v697
        %s717 = scalar_lea.vmem [#allocation1], 3
        %v718 = vld [vmem:[%s717] ss:$9 sm:$0xff]
        %719 = vrot.lane.b32.xlu0 %v718, 80
        %v720 = vpop.permute.xlu0 %719
        %v722 = vadd.f32 %v715, %v720
        %723 = vst [vmem:[#allocation1] sm:$0xff] %v697
        %s724 = scalar_lea.vmem [#allocation1], 4
        %v725 = vld [vmem:[%s724] ss:$9 sm:$0xff]
        %726 = vrot.lane.b32.xlu0 %v725, 64
        %v727 = vpop.permute.xlu0 %726
        %v729 = vadd.f32 %v722, %v727
        %730 = vst [vmem:[#allocation1] sm:$0xff] %v697
        %s731 = scalar_lea.vmem [#allocation1], 5
        %v732 = vld [vmem:[%s731] ss:$9 sm:$0xff]
        %733 = vrot.lane.b32.xlu0 %v732, 48
        %v734 = vpop.permute.xlu0 %733
        %v736 = vadd.f32 %v729, %v734
        %737 = vst [vmem:[#allocation1] sm:$0xff] %v697
        %s738 = scalar_lea.vmem [#allocation1], 6
        %v739 = vld [vmem:[%s738] ss:$9 sm:$0xff]
        %740 = vrot.lane.b32.xlu0 %v739, 32
        %v741 = vpop.permute.xlu0 %740
        %v743 = vadd.f32 %v736, %v741
        %744 = vst [vmem:[#allocation1] sm:$0xff] %v697
        %s745 = scalar_lea.vmem [#allocation1], 7
        %v746 = vld [vmem:[%s745] ss:$9 sm:$0xff]
        %747 = vrot.lane.b32.xlu0 %v746, 16
        %v748 = vpop.permute.xlu0 %747
        %v750 = vadd.f32 %v743, %v748
        %vm751 = vcmask 73728
        %752 = vst.msk [vmem:[%s372] sm:$0x1] %vm751, %v750
        %s753 = sand.u32 %s115, 1
        %s754 = scalar_lea.sflag [#allocation4], %s753
        %s755 = sand.u32 %s115, 1
        %s756 = scalar_lea.vmem [#allocation3], %s755
        // Predicated region
        $region60: #{conv_layer_net_forward.1} parent=54 // pred_check
          %p757 = pneg %p125
        $region61: #{conv_layer_net_forward.1} parent=54 // pred_check_branch
          %759 = sbr.rel (%p757) target = $region63
        $region62: #{conv_layer_net_forward.1} parent=54 // pred_region
          %761 = vsyncadd %s754, 0
          %s762 = scalar_lea.hbm %s4, %s18
          %s764 = sshll.u32 %s756, 4
          %s765 = int_to_ptr.vmem [resolvable:$true] %s764
          %s766 = sshll.u32 %s762, 4
          %s767 = int_to_ptr.hbm [resolvable:$true] %s766
          %769 = dma.vmem_to_hbm [thread:$0]  %s765, 16, %s767, %s754
        $region63: #{conv_layer_net_forward.1} parent=54 // pred_fallthru
          _
      $region55: #{conv_layer_net_forward.1} parent=5 // pred_fallthru
        _
      %p770 = scmp.le.s32.totalorder 2, %s13
      // Predicated region
      $region64: #{conv_layer_net_forward.1} parent=5 // pred_check
        %p771 = pneg %p770
      $region65: #{conv_layer_net_forward.1} parent=5 // pred_check_branch
        %773 = sbr.rel (%p771) target = $region67
      $region66: #{conv_layer_net_forward.1} parent=5 // pred_region
        %s774 = ssub.s32 %s13, 2
        // Predicated region
        $region68: #{conv_layer_net_forward.1} parent=66 // pred_check
          %p775 = pneg %p131
        $region69: #{conv_layer_net_forward.1} parent=66 // pred_check_branch
          %777 = sbr.rel (%p775) target = $region71
        $region70: #{conv_layer_net_forward.1} parent=66 // pred_region
          %s778 = sand.u32 %s116, 1
          %s779 = scalar_lea.sflag [#allocation4], %s778
          %s780 = sand.u32 %s116, 1
          %s781 = scalar_lea.vmem [#allocation3], %s780
          %783 = dma.done %s779, 16
        $region71: #{conv_layer_net_forward.1} parent=66 // pred_fallthru
          _
      $region67: #{conv_layer_net_forward.1} parent=5 // pred_fallthru
        _
    $region6: #{conv_layer_net_forward.1} parent=1 // loop_footer
      %s17 = sadd.s32 1, %s13
    $region7: #{conv_layer_net_forward.1} parent=1 // loop_footer_branch
      %12 = sbr.rel target = $region3
    $region8: #{conv_layer_net_forward.1} parent=1 // loop_exit
      _
    %784 = vsyncpa [#allocation4], 1
    %s785 = scalar_lea.sflag [#allocation4], 1
    %786 = vsyncpa %s785, 1

</llo_original>
